<compile_context>
chip_gen: v5e
topology: v5e:2x2
jax: 0.10.0
libtpu: 0.0.40
codegen_flags: <defaults>
</compile_context>

<pallas_src>
import functools

import jax
import jax.numpy as jnp
from jax.experimental import pallas as pl
from jax.experimental.pallas import tpu as pltpu

_BN_EPS = 1e-5
_VMEM_LIMIT = 48 * 1024 * 1024   # fits v7x's 64 MiB physical VMEM with headroom
_RESIDENT_K_BUDGET = 40 * 1024 * 1024


def _round_up(v, m):
    return (v + m - 1) // m * m


def _im2col(x, kh, kw, stride, padding):
    """x: (N, C, H, W) -> patches (N*OH*OW, C*kh*kw), feature order (C, kh, kw)."""
    if padding > 0:
        x = jnp.pad(x, ((0, 0), (0, 0), (padding, padding), (padding, padding)))
    n, c, h, w = x.shape
    oh = (h - kh) // stride + 1
    ow = (w - kw) // stride + 1
    pieces = []
    for i in range(kh):
        for j in range(kw):
            pieces.append(
                x[:, :, i : i + stride * oh : stride, j : j + stride * ow : stride])
    p = jnp.stack(pieces, axis=0).reshape(kh, kw, n, c, oh, ow)
    # -> (N, OH, OW, C, kh, kw): flattened feature axis = (C, kh, kw), matching
    # torch weight.reshape(OC, C*kh*kw).
    p = p.transpose(2, 4, 5, 3, 0, 1).reshape(n * oh * ow, c * kh * kw)
    return p, oh, ow


def _gemm_stats_kernel(p_ref, w_ref, y_ref, sum_ref, sq_ref):
    """Resident-K path: one bf16 MXU dot per (M, OC) tile + per-tile BN partials."""
    y = jnp.dot(p_ref[...], w_ref[...], preferred_element_type=jnp.float32)
    y_ref[...] = y.astype(y_ref.dtype)
    s = jnp.sum(y, axis=0, keepdims=True)        # (1, boc), f32
    sq = jnp.sum(y * y, axis=0, keepdims=True)   # (1, boc), f32
    sum_ref[...] = jnp.broadcast_to(s, sum_ref.shape)   # lane-dense (8, boc) partials
    sq_ref[...] = jnp.broadcast_to(sq, sq_ref.shape)


def _gemm_stats_kernel_ktiled(p_ref, w_ref, y_ref, sum_ref, sq_ref, acc_ref):
    """Large-K fallback: K grid axis innermost, f32 VMEM accumulator."""
    k = pl.program_id(2)

    @pl.when(k == 0)
    def _():
        acc_ref[...] = jnp.zeros_like(acc_ref)

    acc_ref[...] += jnp.dot(p_ref[...], w_ref[...],
                            preferred_element_type=jnp.float32)

    @pl.when(k == pl.num_programs(2) - 1)
    def _():
        y = acc_ref[...]
        y_ref[...] = y.astype(y_ref.dtype)
        sum_ref[...] = jnp.broadcast_to(
            jnp.sum(y, axis=0, keepdims=True), sum_ref.shape)
        sq_ref[...] = jnp.broadcast_to(
            jnp.sum(y * y, axis=0, keepdims=True), sq_ref.shape)


def _bn_relu_kernel(y_ref, scale_ref, shift_ref, o_ref):
    """Sweep 2: folded BN + ReLU, out = max(y * scale + shift, 0)."""
    y = y_ref[...].astype(jnp.float32)
    o_ref[...] = jnp.maximum(y * scale_ref[...] + shift_ref[...], 0.0)


@functools.partial(
    jax.jit,
    static_argnames=("kernel_size", "stride", "padding",
                     "block_m", "block_k", "block_oc"))
def conv_layer2d(x, weight, bias, gamma, beta, *, kernel_size, stride, padding,
                 block_m=1024, block_k=1024, block_oc=512):
    """Forward of ConvLayer2d. x: (N, C, H, W) float32. Returns (N, OC, OH, OW).

    `bias` is accepted for API parity but intentionally NOT applied: a per-channel
    conv bias is exactly cancelled by training-mode BatchNorm.
    """
    del bias
    n, c, _, _ = x.shape
    oc = weight.shape[0]
    kh = kw = kernel_size

    patches, oh, ow = _im2col(x, kh, kw, stride, padding)   # (M, K) f32
    m, k_dim = patches.shape

    # ---- Block sizes first, padded dims rounded up to them ------------------
    bm = _round_up(min(block_m, _round_up(m, 8)), 8)
    mp = _round_up(m, bm)
    mt = mp // bm

    boc = _round_up(min(block_oc, _round_up(oc, 128)), 128)
    ocp = _round_up(oc, boc)
    ot = ocp // boc

    kp_res = _round_up(k_dim, 128)
    # Double-buffered bf16 inputs + bf16 y block + stats, if K kept resident.
    resident_bytes = (2 * bm * kp_res * 2 + 2 * kp_res * boc * 2
                      + 2 * bm * boc * 2 + 4 * 8 * boc * 4)
    use_k_tiling = resident_bytes > _RESIDENT_K_BUDGET
    if use_k_tiling:
        bk = _round_up(min(block_k, kp_res), 128)
        kp = _round_up(k_dim, bk)
        kt = kp // bk
    else:
        kp = kp_res

    # Zero padding is harmless: padded rows/cols contribute nothing to the matmul
    # nor to the BN sums (we divide by the true M).
    patches_p = jnp.zeros((mp, kp), jnp.bfloat16).at[:m, :k_dim].set(
        patches.astype(jnp.bfloat16))
    w_p = jnp.zeros((kp, ocp), jnp.bfloat16).at[:k_dim, :oc].set(
        weight.reshape(oc, c * kh * kw).T.astype(jnp.bfloat16))
    gamma_p = jnp.zeros((ocp,), jnp.float32).at[:oc].set(gamma.astype(jnp.float32))
    beta_p = jnp.zeros((ocp,), jnp.float32).at[:oc].set(beta.astype(jnp.float32))

    # ---- Sweep 1: bf16 GEMM + per-tile per-channel sum / sum-of-squares -----
    out_shapes = (
        jax.ShapeDtypeStruct((mp, ocp), jnp.bfloat16),
        jax.ShapeDtypeStruct((mt * 8, ocp), jnp.float32),
        jax.ShapeDtypeStruct((mt * 8, ocp), jnp.float32),
    )
    gemm_cost = pl.CostEstimate(
        flops=2 * mp * kp * ocp,
        transcendentals=0,
        bytes_accessed=2 * (mp * kp + mt * kp * ocp + mp * ocp) + 4 * 2 * mt * 8 * ocp)

    if not use_k_tiling:
        y, part_sum, part_sq = pl.pallas_call(
            _gemm_stats_kernel,
            out_shape=out_shapes,
            grid_spec=pltpu.PrefetchScalarGridSpec(
                num_scalar_prefetch=0,
                grid=(mt, ot),
                in_specs=[
                    pl.BlockSpec((bm, kp), lambda i, j: (i, 0)),
                    pl.BlockSpec((kp, boc), lambda i, j: (0, j)),
                ],
                out_specs=(
                    pl.BlockSpec((bm, boc), lambda i, j: (i, j)),
                    pl.BlockSpec((8, boc), lambda i, j: (i, j)),
                    pl.BlockSpec((8, boc), lambda i, j: (i, j)),
                ),
            ),
            compiler_params=pltpu.CompilerParams(
                dimension_semantics=("parallel", "parallel"),
                vmem_limit_bytes=_VMEM_LIMIT),
            cost_estimate=gemm_cost,
        )(patches_p, w_p)
    else:
        y, part_sum, part_sq = pl.pallas_call(
            _gemm_stats_kernel_ktiled,
            out_shape=out_shapes,
            grid_spec=pltpu.PrefetchScalarGridSpec(
                num_scalar_prefetch=0,
                grid=(mt, ot, kt),
                in_specs=[
                    pl.BlockSpec((bm, bk), lambda i, j, kk: (i, kk)),
                    pl.BlockSpec((bk, boc), lambda i, j, kk: (kk, j)),
                ],
                out_specs=(
                    pl.BlockSpec((bm, boc), lambda i, j, kk: (i, j)),
                    pl.BlockSpec((8, boc), lambda i, j, kk: (i, j)),
                    pl.BlockSpec((8, boc), lambda i, j, kk: (i, j)),
                ),
                scratch_shapes=[pltpu.VMEM((bm, boc), jnp.float32)],
            ),
            compiler_params=pltpu.CompilerParams(
                dimension_semantics=("parallel", "parallel", "arbitrary"),
                vmem_limit_bytes=_VMEM_LIMIT),
            cost_estimate=gemm_cost,
        )(patches_p, w_p)

    # ---- Per-channel scale/shift (tiny OC-sized math, done once) ------------
    m_f = jnp.float32(m)
    ch_sum = part_sum.reshape(mt, 8, ocp)[:, 0, :].sum(axis=0)
    ch_sq = part_sq.reshape(mt, 8, ocp)[:, 0, :].sum(axis=0)
    mean = ch_sum / m_f
    var = jnp.maximum(ch_sq / m_f - mean * mean, 0.0)  # biased var, like PyTorch BN
    inv = jax.lax.rsqrt(var + _BN_EPS)
    scale = (gamma_p * inv).reshape(1, ocp)
    shift = (beta_p - mean * gamma_p * inv).reshape(1, ocp)

    # ---- Sweep 2: folded BN + ReLU epilogue ----------------------------------
    bn_cost = pl.CostEstimate(
        flops=2 * mp * ocp,
        transcendentals=0,
        bytes_accessed=2 * mp * ocp + 4 * mp * ocp + 4 * 2 * ocp)

    out2d = pl.pallas_call(
        _bn_relu_kernel,
        out_shape=jax.ShapeDtypeStruct((mp, ocp), jnp.float32),
        grid_spec=pltpu.PrefetchScalarGridSpec(
            num_scalar_prefetch=0,
            grid=(mt, ot),
            in_specs=[
                pl.BlockSpec((bm, boc), lambda i, j: (i, j)),
                pl.BlockSpec((1, boc), lambda i, j: (0, j)),
                pl.BlockSpec((1, boc), lambda i, j: (0, j)),
            ],
            out_specs=pl.BlockSpec((bm, boc), lambda i, j: (i, j)),
        ),
        compiler_params=pltpu.CompilerParams(
            dimension_semantics=("parallel", "parallel"),
            vmem_limit_bytes=_VMEM_LIMIT),
        cost_estimate=bn_cost,
    )(y, scale, shift)

    # (Mp, OCp) -> strip padding -> (N, OH, OW, OC) -> NCHW (see TODO at top).
    return out2d[:m, :oc].reshape(n, oh, ow, oc).transpose(0, 3, 1, 2)


def _reference(x, weight, bias, gamma, beta, *, stride, padding):
    """Pure-JAX f32 reference (Conv2d + BN(training batch stats) + ReLU)."""
    y = jax.lax.conv_general_dilated(
        x, weight, window_strides=(stride, stride),
        padding=[(padding, padding), (padding, padding)],
        dimension_numbers=("NCHW", "OIHW", "NCHW"),
    ) + bias.reshape(1, -1, 1, 1)
    mean = jnp.mean(y, axis=(0, 2, 3), keepdims=True)
    var = jnp.mean((y - mean) ** 2, axis=(0, 2, 3), keepdims=True)
    y_hat = (y - mean) * jax.lax.rsqrt(var + 1e-5)
    out = y_hat * gamma.reshape(1, -1, 1, 1) + beta.reshape(1, -1, 1, 1)
    return jnp.maximum(out, 0.0)


if __name__ == "__main__":
    # Small shapes consistent with the module's forward.
    N, C_IN, C_OUT, H, W = 2, 4, 8, 16, 16
    K_SIZE, STRIDE, PAD = 3, 1, 1

    key = jax.random.PRNGKey(0)
    kx, kw_key, kb_key = jax.random.split(key, 3)

    x = jax.random.normal(kx, (N, C_IN, H, W), dtype=jnp.float32)

    # Deterministic parameter init (Conv2d default-ish uniform; BN gamma=1, beta=0).
    fan_in = C_IN * K_SIZE * K_SIZE
    bound = 1.0 / (fan_in ** 0.5)
    weight = jax.random.uniform(
        kw_key, (C_OUT, C_IN, K_SIZE, K_SIZE), minval=-bound, maxval=bound,
        dtype=jnp.float32)
    bias = jax.random.uniform(kb_key, (C_OUT,), minval=-bound, maxval=bound,
                              dtype=jnp.float32)
    gamma = jnp.ones((C_OUT,), dtype=jnp.float32)
    beta = jnp.zeros((C_OUT,), dtype=jnp.float32)

    # block_m=256 so the tiny test exercises multiple M tiles (per-tile BN partials
    # + cross-tile reduction); defaults (1024/1024/512) are for real shapes.
    out = conv_layer2d(x, weight, bias, gamma, beta,
                       kernel_size=K_SIZE, stride=STRIDE, padding=PAD,
                       block_m=256)
    out = jax.block_until_ready(out)

    ref = _reference(x, weight, bias, gamma, beta, stride=STRIDE, padding=PAD)
    assert out.shape == (N, C_OUT, H, W)
    # bf16 MXU operands + bf16 intermediate y vs a pure-f32 reference -> loosened tol.
    assert bool(jnp.allclose(out, ref, atol=5e-2, rtol=5e-2)), "mismatch vs reference"

    print("KERNEL_OK")
</pallas_src>

<mosaic_0001>
module attributes {stable_mosaic.version = 11 : i64} {
  func.func @_gemm_stats_kernel(%arg0: i32, %arg1: i32, %arg2: memref<256x128xbf16, #tpu.memory_space<vmem>>, %arg3: memref<128x128xbf16, #tpu.memory_space<vmem>>, %arg4: memref<256x128xbf16, #tpu.memory_space<vmem>>, %arg5: memref<8x128xf32, #tpu.memory_space<vmem>>, %arg6: memref<8x128xf32, #tpu.memory_space<vmem>>) attributes {dimension_semantics = [#tpu.dimension_semantics<parallel>, #tpu.dimension_semantics<parallel>], iteration_bounds = array<i64: 2, 1>, scalar_prefetch = 0 : i64, scratch_operands = 0 : i64, tpu.core_type = #tpu.core_type<tc>, window_params = [{transform_indices = @transform_0, window_bounds = array<i64: 256, 128>}, {transform_indices = @transform_1, window_bounds = array<i64: 128, 128>}, {transform_indices = @transform_2, window_bounds = array<i64: 256, 128>}, {transform_indices = @transform_3, window_bounds = array<i64: 8, 128>}, {transform_indices = @transform_4, window_bounds = array<i64: 8, 128>}]} {
    %c0 = arith.constant 0 : index
    %c0_0 = arith.constant 0 : index
    %0 = vector.load %arg2[%c0, %c0_0] : memref<256x128xbf16, #tpu.memory_space<vmem>>, vector<256x128xbf16>
    %c0_1 = arith.constant 0 : index
    %c0_2 = arith.constant 0 : index
    %1 = vector.load %arg3[%c0_1, %c0_2] : memref<128x128xbf16, #tpu.memory_space<vmem>>, vector<128x128xbf16>
    %cst = arith.constant dense<0.000000e+00> : vector<256x128xf32>
    %2 = tpu.matmul %0, %1, %cst {dimension_numbers = #tpu.dot_dimension_numbers<[1], [0], [0], [1], [0, 0, 1, 1], [], []>} : vector<256x128xbf16>, vector<128x128xbf16>, vector<256x128xf32> -> vector<256x128xf32>
    %3 = arith.truncf %2 : vector<256x128xf32> to vector<256x128xbf16>
    %c0_3 = arith.constant 0 : index
    %c0_4 = arith.constant 0 : index
    %4 = vector.load %arg4[%c0_3, %c0_4] : memref<256x128xbf16, #tpu.memory_space<vmem>>, vector<256x128xbf16>
    tpu.vector_store %arg4[%c0_3, %c0_4], %3 {strides = array<i32>} : memref<256x128xbf16, #tpu.memory_space<vmem>>, vector<256x128xbf16>,
    %cst_5 = arith.constant dense<0.000000e+00> : vector<128xf32>
    %5 = vector.multi_reduction <add>, %2, %cst_5 [0] : vector<256x128xf32> to vector<128xf32>
    %6 = vector.shape_cast %5 : vector<128xf32> to vector<1x128xf32>
    %7 = arith.mulf %2, %2 : vector<256x128xf32>
    %cst_6 = arith.constant dense<0.000000e+00> : vector<128xf32>
    %8 = vector.multi_reduction <add>, %7, %cst_6 [0] : vector<256x128xf32> to vector<128xf32>
    %9 = vector.shape_cast %8 : vector<128xf32> to vector<1x128xf32>
    %10 = vector.shape_cast %6 : vector<1x128xf32> to vector<1x128xf32>
    %11 = vector.broadcast %10 : vector<1x128xf32> to vector<8x128xf32>
    %c0_7 = arith.constant 0 : index
    %c0_8 = arith.constant 0 : index
    %12 = vector.load %arg5[%c0_7, %c0_8] : memref<8x128xf32, #tpu.memory_space<vmem>>, vector<8x128xf32>
    tpu.vector_store %arg5[%c0_7, %c0_8], %11 {strides = array<i32>} : memref<8x128xf32, #tpu.memory_space<vmem>>, vector<8x128xf32>,
    %13 = vector.shape_cast %9 : vector<1x128xf32> to vector<1x128xf32>
    %14 = vector.broadcast %13 : vector<1x128xf32> to vector<8x128xf32>
    %c0_9 = arith.constant 0 : index
    %c0_10 = arith.constant 0 : index
    %15 = vector.load %arg6[%c0_9, %c0_10] : memref<8x128xf32, #tpu.memory_space<vmem>>, vector<8x128xf32>
    tpu.vector_store %arg6[%c0_9, %c0_10], %14 {strides = array<i32>} : memref<8x128xf32, #tpu.memory_space<vmem>>, vector<8x128xf32>,
    return
  }
  func.func @transform_0(%arg0: i32, %arg1: i32) -> (i32, i32) {
    %c0_i32 = arith.constant 0 : i32
    %c0_i32_0 = arith.constant 0 : i32
    return %arg0, %c0_i32 : i32, i32
  }
  func.func @transform_1(%arg0: i32, %arg1: i32) -> (i32, i32) {
    %c0_i32 = arith.constant 0 : i32
    %c0_i32_0 = arith.constant 0 : i32
    return %c0_i32, %arg1 : i32, i32
  }
  func.func @transform_2(%arg0: i32, %arg1: i32) -> (i32, i32) {
    %c0_i32 = arith.constant 0 : i32
    return %arg0, %arg1 : i32, i32
  }
  func.func @transform_3(%arg0: i32, %arg1: i32) -> (i32, i32) {
    %c0_i32 = arith.constant 0 : i32
    return %arg0, %arg1 : i32, i32
  }
  func.func @transform_4(%arg0: i32, %arg1: i32) -> (i32, i32) {
    %c0_i32 = arith.constant 0 : i32
    return %arg0, %arg1 : i32, i32
  }
}

module attributes {stable_mosaic.version = 11 : i64} {
  func.func @_bn_relu_kernel(%arg0: i32, %arg1: i32, %arg2: memref<256x128xbf16, #tpu.memory_space<vmem>>, %arg3: memref<1x128xf32, #tpu.memory_space<vmem>>, %arg4: memref<1x128xf32, #tpu.memory_space<vmem>>, %arg5: memref<256x128xf32, #tpu.memory_space<vmem>>) attributes {dimension_semantics = [#tpu.dimension_semantics<parallel>, #tpu.dimension_semantics<parallel>], iteration_bounds = array<i64: 2, 1>, scalar_prefetch = 0 : i64, scratch_operands = 0 : i64, tpu.core_type = #tpu.core_type<tc>, window_params = [{transform_indices = @transform_0, window_bounds = array<i64: 256, 128>}, {transform_indices = @transform_1, window_bounds = array<i64: 1, 128>}, {transform_indices = @transform_2, window_bounds = array<i64: 1, 128>}, {transform_indices = @transform_3, window_bounds = array<i64: 256, 128>}]} {
    %c0 = arith.constant 0 : index
    %c0_0 = arith.constant 0 : index
    %0 = vector.load %arg2[%c0, %c0_0] : memref<256x128xbf16, #tpu.memory_space<vmem>>, vector<256x128xbf16>
    %1 = arith.extf %0 : vector<256x128xbf16> to vector<256x128xf32>
    %c0_1 = arith.constant 0 : index
    %c0_2 = arith.constant 0 : index
    %2 = vector.load %arg3[%c0_1, %c0_2] : memref<1x128xf32, #tpu.memory_space<vmem>>, vector<1x128xf32>
    %3 = vector.broadcast %2 : vector<1x128xf32> to vector<256x128xf32>
    %4 = arith.mulf %1, %3 : vector<256x128xf32>
    %c0_3 = arith.constant 0 : index
    %c0_4 = arith.constant 0 : index
    %5 = vector.load %arg4[%c0_3, %c0_4] : memref<1x128xf32, #tpu.memory_space<vmem>>, vector<1x128xf32>
    %6 = vector.broadcast %5 : vector<1x128xf32> to vector<256x128xf32>
    %7 = arith.addf %4, %6 : vector<256x128xf32>
    %cst = arith.constant 0.000000e+00 : f32
    %8 = vector.broadcast %cst : f32 to vector<256x128xf32>
    %9 = arith.maximumf %7, %8 : vector<256x128xf32>
    %c0_5 = arith.constant 0 : index
    %c0_6 = arith.constant 0 : index
    %10 = vector.load %arg5[%c0_5, %c0_6] : memref<256x128xf32, #tpu.memory_space<vmem>>, vector<256x128xf32>
    tpu.vector_store %arg5[%c0_5, %c0_6], %9 {strides = array<i32>} : memref<256x128xf32, #tpu.memory_space<vmem>>, vector<256x128xf32>,
    return
  }
  func.func @transform_0(%arg0: i32, %arg1: i32) -> (i32, i32) {
    %c0_i32 = arith.constant 0 : i32
    return %arg0, %arg1 : i32, i32
  }
  func.func @transform_1(%arg0: i32, %arg1: i32) -> (i32, i32) {
    %c0_i32 = arith.constant 0 : i32
    %c0_i32_0 = arith.constant 0 : i32
    return %c0_i32, %arg1 : i32, i32
  }
  func.func @transform_2(%arg0: i32, %arg1: i32) -> (i32, i32) {
    %c0_i32 = arith.constant 0 : i32
    %c0_i32_0 = arith.constant 0 : i32
    return %c0_i32, %arg1 : i32, i32
  }
  func.func @transform_3(%arg0: i32, %arg1: i32) -> (i32, i32) {
    %c0_i32 = arith.constant 0 : i32
    return %arg0, %arg1 : i32, i32
  }
}

</mosaic_0001>

<llo_original>
// kernel: conv_layer2d.3
$region0: #{conv_layer2d.3}
  #allocation0 [shape = 'u32[]', space=smem, size = 0x4, offset = 0x4, fixed_abs, tag = 'smem constant byte address 0x4 - core index']
  #allocation1 [shape = 'u32[72,128]{1,0:T(1,128)}', space=vmem, size = 0x9000, scoped, tag = 'internal scratch']
  %s0 = inlined_call_operand.vmem [shape: bf16[512,128], index: 0, kind: input, shape index: {}]
  %s1 = inlined_call_operand.vmem [shape: f32[1,128], index: 1, kind: input, shape index: {}]
  %s2 = inlined_call_operand.vmem [shape: f32[1,128], index: 2, kind: input, shape index: {}]
  %s3 = inlined_call_operand.vmem [shape: f32[512,128], index: 3, kind: output, shape index: {}]
  %s4 = sld [smem:[#allocation0]]
  $region45: #{conv_layer2d.3} parent=0
    _
  %s6 = ssub.s32 1, %s4
  %s7 = scalar_select 0, %s6, %s4
  loop: start=0, step=1, limit=4
  $region2: #{conv_layer2d.3} parent=0 // loop_pre_header
    _
  $region3: #{conv_layer2d.3} parent=0 // loop_header
    %s9 = sphi 0, %s13
    %p10 = scmp.ge.s32.totalorder %s9, 4
    %s16 = sphi 0, %s28
    %s17 = sphi 0, %s24
    %s18 = sphi 0, %s16
    %s19 = sphi 0, %s17
    %s20 = sphi 0, %s18
    %s21 = sphi 0, %s19
    %s33 = sphi 0, %s35
    %s36 = sphi 0, %s33
    %s37 = sphi 0, %s36
    %s53 = sphi 0, %s37
    %s59 = sphi 0, %s61
    %s62 = sphi 0, %s59
    %s63 = sphi 0, %s62
    %s79 = sphi 0, %s63
    %s85 = sphi 0, %s87
    %s88 = sphi 0, %s85
    %s89 = sphi 0, %s88
    %s105 = sphi 0, %s89
    %s113 = sphi 0, %s115
    %s116 = sphi 0, %s113
    %s117 = sphi 0, %s116
    %s133 = sphi 0, %s117
  $region4: #{conv_layer2d.3} parent=0 // loop_header_branch
    %12 = sbr.rel (%p10) target = $region8
  $region5: #{conv_layer2d.3} parent=0 // loop_body
    %s14 = ssub.s32 %s9, 1
    %s15 = ssub.s32 %s9, 2
    %s22 = sadd.s32 1, %s17
    %p23 = scmp.ge.s32.totalorder %s22, 1
    %s24 = scalar_select %p23, 0, %s22
    %s25 = sadd.s32 1, %s16
    %s26 = scalar_select %p23, %s25, %s16
    %p27 = scmp.ge.s32.totalorder %s26, 2
    %s28 = scalar_select %p27, 0, %s26
    %s29 = ssub.s32 %s16, %s28
    %s30 = ssub.s32 %s17, %s24
    %s31 = sor.u32 %s29, %s30
    %p32 = scmp.eq.s32.totalorder %s31, 0
    %s34 = sadd.s32 %s33, 1
    %s35 = scalar_select %p32, %s33, %s34
    %p38 = pneg %p32
    %p39 = scmp.eq.s32.totalorder %s9, 1
    %p40 = por %p38, %p39
    %p41 = scmp.ne.s32.totalorder %s33, %s36
    %p42 = scmp.eq.s32.totalorder %s9, 0
    %p43 = por %p41, %p42
    %p44 = scmp.ne.s32.totalorder %s33, %s36
    %p45 = scmp.eq.s32.totalorder %s14, 1
    %p46 = por %p44, %p45
    %p47 = scmp.ne.s32.totalorder %s36, %s37
    %p48 = scmp.eq.s32.totalorder %s14, 0
    %p49 = por %p47, %p48
    %p50 = scmp.ne.s32.totalorder %s36, %s37
    %p51 = scmp.eq.s32.totalorder %s15, 1
    %p52 = por %p50, %p51
    %p54 = scmp.ne.s32.totalorder %s37, %s53
    %p55 = scmp.eq.s32.totalorder %s15, 0
    %p56 = por %p54, %p55
    %s57 = ssub.s32 %s17, %s24
    %p58 = scmp.eq.s32.totalorder %s57, 0
    %s60 = sadd.s32 %s59, 1
    %s61 = scalar_select %p58, %s59, %s60
    %p64 = pneg %p58
    %p65 = scmp.eq.s32.totalorder %s9, 1
    %p66 = por %p64, %p65
    %p67 = scmp.ne.s32.totalorder %s59, %s62
    %p68 = scmp.eq.s32.totalorder %s9, 0
    %p69 = por %p67, %p68
    %p70 = scmp.ne.s32.totalorder %s59, %s62
    %p71 = scmp.eq.s32.totalorder %s14, 1
    %p72 = por %p70, %p71
    %p73 = scmp.ne.s32.totalorder %s62, %s63
    %p74 = scmp.eq.s32.totalorder %s14, 0
    %p75 = por %p73, %p74
    %p76 = scmp.ne.s32.totalorder %s62, %s63
    %p77 = scmp.eq.s32.totalorder %s15, 1
    %p78 = por %p76, %p77
    %p80 = scmp.ne.s32.totalorder %s63, %s79
    %p81 = scmp.eq.s32.totalorder %s15, 0
    %p82 = por %p80, %p81
    %s83 = ssub.s32 %s17, %s24
    %p84 = scmp.eq.s32.totalorder %s83, 0
    %s86 = sadd.s32 %s85, 1
    %s87 = scalar_select %p84, %s85, %s86
    %p90 = pneg %p84
    %p91 = scmp.eq.s32.totalorder %s9, 1
    %p92 = por %p90, %p91
    %p93 = scmp.ne.s32.totalorder %s85, %s88
    %p94 = scmp.eq.s32.totalorder %s9, 0
    %p95 = por %p93, %p94
    %p96 = scmp.ne.s32.totalorder %s85, %s88
    %p97 = scmp.eq.s32.totalorder %s14, 1
    %p98 = por %p96, %p97
    %p99 = scmp.ne.s32.totalorder %s88, %s89
    %p100 = scmp.eq.s32.totalorder %s14, 0
    %p101 = por %p99, %p100
    %p102 = scmp.ne.s32.totalorder %s88, %s89
    %p103 = scmp.eq.s32.totalorder %s15, 1
    %p104 = por %p102, %p103
    %p106 = scmp.ne.s32.totalorder %s89, %s105
    %p107 = scmp.eq.s32.totalorder %s15, 0
    %p108 = por %p106, %p107
    %s109 = ssub.s32 %s16, %s28
    %s110 = ssub.s32 %s17, %s24
    %s111 = sor.u32 %s109, %s110
    %p112 = scmp.eq.s32.totalorder %s111, 0
    %s114 = sadd.s32 %s113, 1
    %s115 = scalar_select %p112, %s113, %s114
    %p118 = pneg %p112
    %p119 = scmp.eq.s32.totalorder %s9, 1
    %p120 = por %p118, %p119
    %p121 = scmp.ne.s32.totalorder %s113, %s116
    %p122 = scmp.eq.s32.totalorder %s9, 0
    %p123 = por %p121, %p122
    %p124 = scmp.ne.s32.totalorder %s113, %s116
    %p125 = scmp.eq.s32.totalorder %s14, 1
    %p126 = por %p124, %p125
    %p127 = scmp.ne.s32.totalorder %s116, %s117
    %p128 = scmp.eq.s32.totalorder %s14, 0
    %p129 = por %p127, %p128
    %p130 = scmp.ne.s32.totalorder %s116, %s117
    %p131 = scmp.eq.s32.totalorder %s15, 1
    %p132 = por %p130, %p131
    %p134 = scmp.ne.s32.totalorder %s117, %s133
    %p135 = scmp.eq.s32.totalorder %s15, 0
    %p136 = por %p134, %p135
    %p137 = scmp.le.s32.totalorder 1, %s9
    %p138 = scmp.lt.s32.totalorder %s9, 3
    %p139 = pnand %p137, %p138
    %p140 = pneg %p139
    // Predicated region
    $region9: #{conv_layer2d.3} parent=5 // pred_check
      _
    $region10: #{conv_layer2d.3} parent=5 // pred_check_branch
      %142 = sbr.rel (%p139) target = $region12
    $region11: #{conv_layer2d.3} parent=5 // pred_region
      %s143 = ssub.s32 %s9, 1
      // Predicated region
      $region13: #{conv_layer2d.3} parent=11 // pred_check
        %p144 = pneg %p75
      $region14: #{conv_layer2d.3} parent=11 // pred_check_branch
        %146 = sbr.rel (%p144) target = $region16
      $region15: #{conv_layer2d.3} parent=11 // pred_region
        %p147 = scmp.lt.s32.totalorder %s19, 0
        %s148 = scalar_select %p147, %s19, 0
        %s149 = scalar_lea.vmem %s1, %s148
      $region16: #{conv_layer2d.3} parent=11 // pred_fallthru
        _
      // Predicated region
      $region17: #{conv_layer2d.3} parent=11 // pred_check
        %p150 = pneg %p101
      $region18: #{conv_layer2d.3} parent=11 // pred_check_branch
        %152 = sbr.rel (%p150) target = $region20
      $region19: #{conv_layer2d.3} parent=11 // pred_region
        %p153 = scmp.lt.s32.totalorder %s19, 0
        %s154 = scalar_select %p153, %s19, 0
        %s155 = scalar_lea.vmem %s2, %s154
      $region20: #{conv_layer2d.3} parent=11 // pred_fallthru
        _
    $region12: #{conv_layer2d.3} parent=5 // pred_fallthru
      _
    %p156 = scmp.lt.s32.totalorder %s9, 2
    // Predicated region
    $region21: #{conv_layer2d.3} parent=5 // pred_check
      %p157 = pneg %p156
    $region22: #{conv_layer2d.3} parent=5 // pred_check_branch
      %159 = sbr.rel (%p157) target = $region24
    $region23: #{conv_layer2d.3} parent=5 // pred_region
      // Predicated region
      $region25: #{conv_layer2d.3} parent=23 // pred_check
        %p160 = pneg %p43
      $region26: #{conv_layer2d.3} parent=23 // pred_check_branch
        %162 = sbr.rel (%p160) target = $region28
      $region27: #{conv_layer2d.3} parent=23 // pred_region
        %s163 = smul.u32 32, %s16
        %p164 = scmp.lt.s32.totalorder %s163, 63
        %s165 = scalar_select %p164, %s163, 63
        %p166 = scmp.lt.s32.totalorder %s17, 0
        %s167 = scalar_select %p166, %s17, 0
        %s168 = sadd.s32 %s167, %s165
        %s169 = smul.addr %s168, 4
        %s170 = scalar_lea.vmem %s0, %s169
        %s171 = smul.u32 32, %s16
      $region28: #{conv_layer2d.3} parent=23 // pred_fallthru
        _
    $region24: #{conv_layer2d.3} parent=5 // pred_fallthru
      _
    %p172 = scmp.le.s32.totalorder 1, %s9
    %p173 = scmp.lt.s32.totalorder %s9, 3
    %p174 = pnand %p172, %p173
    %p175 = pneg %p174
    // Predicated region
    $region29: #{conv_layer2d.3} parent=5 // pred_check
      _
    $region30: #{conv_layer2d.3} parent=5 // pred_check_branch
      %177 = sbr.rel (%p174) target = $region32
    $region31: #{conv_layer2d.3} parent=5 // pred_region
      %s178 = ssub.s32 %s9, 1
      %s179 = smul.u32 32, %s18
      %p180 = scmp.lt.s32.totalorder %s179, 63
      %s181 = scalar_select %p180, %s179, 63
      %p182 = scmp.lt.s32.totalorder %s19, 0
      %s183 = scalar_select %p182, %s19, 0
      %s184 = sadd.s32 %s183, %s181
      %s185 = smul.addr %s184, 4
      %s186 = scalar_lea.vmem %s0, %s185
      %p187 = pneg %p49
      %p188 = pneg %p46
      %p189 = scmp.lt.s32.totalorder %s19, 0
      %s190 = scalar_select %p189, %s19, 0
      %s191 = scalar_lea.vmem %s1, %s190
      %p192 = pneg %p75
      %p193 = pneg %p72
      %p194 = scmp.lt.s32.totalorder %s19, 0
      %s195 = scalar_select %p194, %s19, 0
      %s196 = scalar_lea.vmem %s2, %s195
      %p197 = pneg %p101
      %p198 = pneg %p98
      %p199 = pneg %p129
      %p200 = pneg %p126
      %s201 = smul.u32 32, %s18
      %p202 = scmp.lt.s32.totalorder %s201, 63
      %s203 = scalar_select %p202, %s201, 63
      %p204 = scmp.lt.s32.totalorder %s19, 0
      %s205 = scalar_select %p204, %s19, 0
      %s206 = sadd.s32 %s205, %s203
      %s207 = smul.addr %s206, 8
      %s208 = scalar_lea.vmem %s3, %s207
      %s209 = smul.u32 32, %s18
      %p210 = scmp.lt.s32.totalorder %s209, 63
      %s211 = scalar_select %p210, %s209, 63
      %p212 = scmp.lt.s32.totalorder %s19, 0
      %s213 = scalar_select %p212, %s19, 0
      %s214 = sadd.s32 %s213, %s211
      %s215 = smul.addr %s214, 4
      %s216 = scalar_lea.vmem %s0, %s215
      %s217 = smul.u32 32, %s18
      %p218 = scmp.lt.s32.totalorder %s19, 0
      %s219 = scalar_select %p218, %s19, 0
      %s220 = scalar_lea.vmem %s1, %s219
      %p221 = scmp.lt.s32.totalorder %s19, 0
      %s222 = scalar_select %p221, %s19, 0
      %s223 = scalar_lea.vmem %s2, %s222
      %s224 = smul.u32 32, %s18
      %p225 = scmp.lt.s32.totalorder %s224, 63
      %s226 = scalar_select %p225, %s224, 63
      %p227 = scmp.lt.s32.totalorder %s19, 0
      %s228 = scalar_select %p227, %s19, 0
      %s229 = sadd.s32 %s228, %s226
      %s230 = smul.addr %s229, 8
      %s231 = scalar_lea.vmem %s3, %s230
      %s232 = smul.u32 32, %s18
      %v233 = vld [vmem:[%s216] sm:$0xf]
      %v234 = vld [vmem:[%s216 + $0x4] sm:$0xf]
      %v235 = vld [vmem:[%s216 + $0x8] sm:$0xf]
      %v236 = vld [vmem:[%s216 + $0xc] sm:$0xf]
      %v237 = vld [vmem:[%s216 + $0x10] sm:$0xf]
      %v238 = vld [vmem:[%s216 + $0x14] sm:$0xf]
      %v239 = vld [vmem:[%s216 + $0x18] sm:$0xf]
      %v240 = vld [vmem:[%s216 + $0x1c] sm:$0xf]
      %v241 = vld [vmem:[%s216 + $0x20] sm:$0xf]
      %v242 = vld [vmem:[%s216 + $0x24] sm:$0xf]
      %v243 = vld [vmem:[%s216 + $0x28] sm:$0xf]
      %v244 = vld [vmem:[%s216 + $0x2c] sm:$0xf]
      %v245 = vld [vmem:[%s216 + $0x30] sm:$0xf]
      %v246 = vld [vmem:[%s216 + $0x34] sm:$0xf]
      %v247 = vld [vmem:[%s216 + $0x38] sm:$0xf]
      %v248 = vld [vmem:[%s216 + $0x3c] sm:$0xf]
      %v249 = vld [vmem:[%s216 + $0x40] sm:$0xf]
      %v250 = vld [vmem:[%s216 + $0x44] sm:$0xf]
      %v251 = vld [vmem:[%s216 + $0x48] sm:$0xf]
      %v252 = vld [vmem:[%s216 + $0x4c] sm:$0xf]
      %v253 = vld [vmem:[%s216 + $0x50] sm:$0xf]
      %v254 = vld [vmem:[%s216 + $0x54] sm:$0xf]
      %v255 = vld [vmem:[%s216 + $0x58] sm:$0xf]
      %v256 = vld [vmem:[%s216 + $0x5c] sm:$0xf]
      %v257 = vld [vmem:[%s216 + $0x60] sm:$0xf]
      %v258 = vld [vmem:[%s216 + $0x64] sm:$0xf]
      %v259 = vld [vmem:[%s216 + $0x68] sm:$0xf]
      %v260 = vld [vmem:[%s216 + $0x6c] sm:$0xf]
      %v261 = vld [vmem:[%s216 + $0x70] sm:$0xf]
      %v262 = vld [vmem:[%s216 + $0x74] sm:$0xf]
      %v263 = vld [vmem:[%s216 + $0x78] sm:$0xf]
      %v264 = vld [vmem:[%s216 + $0x7c] sm:$0xf]
      %v265 = vunpack.c.l.bf16 %v233
      %v266 = vunpack.c.l.bf16 %v234
      %v267 = vunpack.c.l.bf16 %v235
      %v268 = vunpack.c.l.bf16 %v236
      %v269 = vunpack.c.l.bf16 %v237
      %v270 = vunpack.c.l.bf16 %v238
      %v271 = vunpack.c.l.bf16 %v239
      %v272 = vunpack.c.l.bf16 %v240
      %v273 = vunpack.c.l.bf16 %v241
      %v274 = vunpack.c.l.bf16 %v242
      %v275 = vunpack.c.l.bf16 %v243
      %v276 = vunpack.c.l.bf16 %v244
      %v277 = vunpack.c.l.bf16 %v245
      %v278 = vunpack.c.l.bf16 %v246
      %v279 = vunpack.c.l.bf16 %v247
      %v280 = vunpack.c.l.bf16 %v248
      %v281 = vunpack.c.l.bf16 %v249
      %v282 = vunpack.c.l.bf16 %v250
      %v283 = vunpack.c.l.bf16 %v251
      %v284 = vunpack.c.l.bf16 %v252
      %v285 = vunpack.c.l.bf16 %v253
      %v286 = vunpack.c.l.bf16 %v254
      %v287 = vunpack.c.l.bf16 %v255
      %v288 = vunpack.c.l.bf16 %v256
      %v289 = vunpack.c.l.bf16 %v257
      %v290 = vunpack.c.l.bf16 %v258
      %v291 = vunpack.c.l.bf16 %v259
      %v292 = vunpack.c.l.bf16 %v260
      %v293 = vunpack.c.l.bf16 %v261
      %v294 = vunpack.c.l.bf16 %v262
      %v295 = vunpack.c.l.bf16 %v263
      %v296 = vunpack.c.l.bf16 %v264
      %v297 = vld [vmem:[%s220] sm:$0x1]
      %v299 = vperm.slane %v297, 0
      %v301 = vmul.f32 %v265, %v299
      %v302 = vmul.f32 %v266, %v299
      %v303 = vmul.f32 %v267, %v299
      %v304 = vmul.f32 %v268, %v299
      %v305 = vmul.f32 %v269, %v299
      %v306 = vmul.f32 %v270, %v299
      %v307 = vmul.f32 %v271, %v299
      %v308 = vmul.f32 %v272, %v299
      %v309 = vmul.f32 %v273, %v299
      %v310 = vmul.f32 %v274, %v299
      %v311 = vmul.f32 %v275, %v299
      %v312 = vmul.f32 %v276, %v299
      %v313 = vmul.f32 %v277, %v299
      %v314 = vmul.f32 %v278, %v299
      %v315 = vmul.f32 %v279, %v299
      %v316 = vmul.f32 %v280, %v299
      %v317 = vmul.f32 %v281, %v299
      %v318 = vmul.f32 %v282, %v299
      %v319 = vmul.f32 %v283, %v299
      %v320 = vmul.f32 %v284, %v299
      %v321 = vmul.f32 %v285, %v299
      %v322 = vmul.f32 %v286, %v299
      %v323 = vmul.f32 %v287, %v299
      %v324 = vmul.f32 %v288, %v299
      %v325 = vmul.f32 %v289, %v299
      %v326 = vmul.f32 %v290, %v299
      %v327 = vmul.f32 %v291, %v299
      %v328 = vmul.f32 %v292, %v299
      %v329 = vmul.f32 %v293, %v299
      %v330 = vmul.f32 %v294, %v299
      %v331 = vmul.f32 %v295, %v299
      %v332 = vmul.f32 %v296, %v299
      %v333 = vld [vmem:[%s223] sm:$0x1]
      %v335 = vperm.slane %v333, 0
      %v337 = vadd.f32 %v301, %v335
      %v338 = vadd.f32 %v302, %v335
      %v339 = vadd.f32 %v303, %v335
      %v340 = vadd.f32 %v304, %v335
      %v341 = vadd.f32 %v305, %v335
      %v342 = vadd.f32 %v306, %v335
      %v343 = vadd.f32 %v307, %v335
      %v344 = vadd.f32 %v308, %v335
      %v345 = vadd.f32 %v309, %v335
      %v346 = vadd.f32 %v310, %v335
      %v347 = vadd.f32 %v311, %v335
      %v348 = vadd.f32 %v312, %v335
      %v349 = vadd.f32 %v313, %v335
      %v350 = vadd.f32 %v314, %v335
      %v351 = vadd.f32 %v315, %v335
      %v352 = vadd.f32 %v316, %v335
      %v353 = vadd.f32 %v317, %v335
      %v354 = vadd.f32 %v318, %v335
      %v355 = vadd.f32 %v319, %v335
      %v356 = vadd.f32 %v320, %v335
      %v357 = vadd.f32 %v321, %v335
      %v358 = vadd.f32 %v322, %v335
      %v359 = vadd.f32 %v323, %v335
      %v360 = vadd.f32 %v324, %v335
      %v361 = vadd.f32 %v325, %v335
      %v362 = vadd.f32 %v326, %v335
      %v363 = vadd.f32 %v327, %v335
      %v364 = vadd.f32 %v328, %v335
      %v365 = vadd.f32 %v329, %v335
      %v366 = vadd.f32 %v330, %v335
      %v367 = vadd.f32 %v331, %v335
      %v368 = vadd.f32 %v332, %v335
      %v369 = vmax.f32 %v337, 0.0
      %v370 = vmax.f32 %v338, 0.0
      %v371 = vmax.f32 %v339, 0.0
      %v372 = vmax.f32 %v340, 0.0
      %v373 = vmax.f32 %v341, 0.0
      %v374 = vmax.f32 %v342, 0.0
      %v375 = vmax.f32 %v343, 0.0
      %v376 = vmax.f32 %v344, 0.0
      %v377 = vmax.f32 %v345, 0.0
      %v378 = vmax.f32 %v346, 0.0
      %v379 = vmax.f32 %v347, 0.0
      %v380 = vmax.f32 %v348, 0.0
      %v381 = vmax.f32 %v349, 0.0
      %v382 = vmax.f32 %v350, 0.0
      %v383 = vmax.f32 %v351, 0.0
      %v384 = vmax.f32 %v352, 0.0
      %v385 = vmax.f32 %v353, 0.0
      %v386 = vmax.f32 %v354, 0.0
      %v387 = vmax.f32 %v355, 0.0
      %v388 = vmax.f32 %v356, 0.0
      %v389 = vmax.f32 %v357, 0.0
      %v390 = vmax.f32 %v358, 0.0
      %v391 = vmax.f32 %v359, 0.0
      %v392 = vmax.f32 %v360, 0.0
      %v393 = vmax.f32 %v361, 0.0
      %v394 = vmax.f32 %v362, 0.0
      %v395 = vmax.f32 %v363, 0.0
      %v396 = vmax.f32 %v364, 0.0
      %v397 = vmax.f32 %v365, 0.0
      %v398 = vmax.f32 %v366, 0.0
      %v399 = vmax.f32 %v367, 0.0
      %v400 = vmax.f32 %v368, 0.0
      %401 = vst [vmem:[%s231] sm:$0xff] %v369
      %402 = vst [vmem:[%s231 + $0x8] sm:$0xff] %v370
      %403 = vst [vmem:[%s231 + $0x10] sm:$0xff] %v371
      %404 = vst [vmem:[%s231 + $0x18] sm:$0xff] %v372
      %405 = vst [vmem:[%s231 + $0x20] sm:$0xff] %v373
      %406 = vst [vmem:[%s231 + $0x28] sm:$0xff] %v374
      %407 = vst [vmem:[%s231 + $0x30] sm:$0xff] %v375
      %408 = vst [vmem:[%s231 + $0x38] sm:$0xff] %v376
      %409 = vst [vmem:[%s231 + $0x40] sm:$0xff] %v377
      %410 = vst [vmem:[%s231 + $0x48] sm:$0xff] %v378
      %411 = vst [vmem:[%s231 + $0x50] sm:$0xff] %v379
      %412 = vst [vmem:[%s231 + $0x58] sm:$0xff] %v380
      %413 = vst [vmem:[%s231 + $0x60] sm:$0xff] %v381
      %414 = vst [vmem:[%s231 + $0x68] sm:$0xff] %v382
      %415 = vst [vmem:[%s231 + $0x70] sm:$0xff] %v383
      %416 = vst [vmem:[%s231 + $0x78] sm:$0xff] %v384
      %417 = vst [vmem:[%s231 + $0x80] sm:$0xff] %v385
      %418 = vst [vmem:[%s231 + $0x88] sm:$0xff] %v386
      %419 = vst [vmem:[%s231 + $0x90] sm:$0xff] %v387
      %420 = vst [vmem:[%s231 + $0x98] sm:$0xff] %v388
      %421 = vst [vmem:[%s231 + $0xa0] sm:$0xff] %v389
      %422 = vst [vmem:[%s231 + $0xa8] sm:$0xff] %v390
      %423 = vst [vmem:[%s231 + $0xb0] sm:$0xff] %v391
      %424 = vst [vmem:[%s231 + $0xb8] sm:$0xff] %v392
      %425 = vst [vmem:[%s231 + $0xc0] sm:$0xff] %v393
      %426 = vst [vmem:[%s231 + $0xc8] sm:$0xff] %v394
      %427 = vst [vmem:[%s231 + $0xd0] sm:$0xff] %v395
      %428 = vst [vmem:[%s231 + $0xd8] sm:$0xff] %v396
      %429 = vst [vmem:[%s231 + $0xe0] sm:$0xff] %v397
      %430 = vst [vmem:[%s231 + $0xe8] sm:$0xff] %v398
      %431 = vst [vmem:[%s231 + $0xf0] sm:$0xff] %v399
      %432 = vst [vmem:[%s231 + $0xf8] sm:$0xff] %v400
      %s433 = smul.u32 32, %s18
      %p434 = scmp.lt.s32.totalorder %s433, 63
      %s435 = scalar_select %p434, %s433, 63
      %p436 = scmp.lt.s32.totalorder %s19, 0
      %s437 = scalar_select %p436, %s19, 0
      %s438 = sadd.s32 %s437, %s435
      %s439 = smul.addr %s438, 8
      %s440 = scalar_lea.vmem %s3, %s439
      // Predicated region
      $region33: #{conv_layer2d.3} parent=31 // pred_check
        %p441 = pneg %p126
      $region34: #{conv_layer2d.3} parent=31 // pred_check_branch
        %443 = sbr.rel (%p441) target = $region36
      $region35: #{conv_layer2d.3} parent=31 // pred_region
        %s444 = smul.u32 32, %s18
      $region36: #{conv_layer2d.3} parent=31 // pred_fallthru
        _
    $region32: #{conv_layer2d.3} parent=5 // pred_fallthru
      _
    %p445 = scmp.le.s32.totalorder 2, %s9
    // Predicated region
    $region37: #{conv_layer2d.3} parent=5 // pred_check
      %p446 = pneg %p445
    $region38: #{conv_layer2d.3} parent=5 // pred_check_branch
      %448 = sbr.rel (%p446) target = $region40
    $region39: #{conv_layer2d.3} parent=5 // pred_region
      %s449 = ssub.s32 %s9, 2
      // Predicated region
      $region41: #{conv_layer2d.3} parent=39 // pred_check
        %p450 = pneg %p132
      $region42: #{conv_layer2d.3} parent=39 // pred_check_branch
        %452 = sbr.rel (%p450) target = $region44
      $region43: #{conv_layer2d.3} parent=39 // pred_region
        %s453 = smul.u32 32, %s20
        %p454 = scmp.lt.s32.totalorder %s453, 63
        %s455 = scalar_select %p454, %s453, 63
        %p456 = scmp.lt.s32.totalorder %s21, 0
        %s457 = scalar_select %p456, %s21, 0
        %s458 = sadd.s32 %s457, %s455
        %s459 = smul.addr %s458, 8
        %s460 = scalar_lea.vmem %s3, %s459
      $region44: #{conv_layer2d.3} parent=39 // pred_fallthru
        _
    $region40: #{conv_layer2d.3} parent=5 // pred_fallthru
      _
  $region6: #{conv_layer2d.3} parent=0 // loop_footer
    %s13 = sadd.s32 1, %s9
  $region7: #{conv_layer2d.3} parent=0 // loop_footer_branch
    %8 = sbr.rel target = $region3
  $region8: #{conv_layer2d.3} parent=0 // loop_exit
    _

// kernel: conv_layer2d.2
$region0: #{conv_layer2d.2}
  #allocation0 [shape = 'u32[]', space=smem, size = 0x4, offset = 0x4, fixed_abs, tag = 'smem constant byte address 0x4 - core index']
  #allocation1 [shape = 'u32[72,128]{1,0:T(1,128)}', space=vmem, size = 0x9000, scoped, tag = 'internal scratch']
  %s0 = inlined_call_operand.vmem [shape: bf16[512,128], index: 0, kind: input, shape index: {}]
  %s1 = inlined_call_operand.vmem [shape: bf16[128,128], index: 1, kind: input, shape index: {}]
  %s2 = inlined_call_operand.vmem [shape: bf16[512,128], index: 2, kind: output, shape index: {0}]
  %s3 = inlined_call_operand.vmem [shape: f32[16,128], index: 3, kind: output, shape index: {1}]
  %s4 = inlined_call_operand.vmem [shape: f32[16,128], index: 4, kind: output, shape index: {2}]
  %5 = xla_tuple %s2, %s3, %s4
  %s6 = sld [smem:[#allocation0]]
  $region57: #{conv_layer2d.2} parent=0
    _
  %s8 = ssub.s32 1, %s6
  %s9 = scalar_select 0, %s8, %s6
  loop: start=0, step=1, limit=4
  $region2: #{conv_layer2d.2} parent=0 // loop_pre_header
    _
  $region3: #{conv_layer2d.2} parent=0 // loop_header
    %s11 = sphi 0, %s15
    %p12 = scmp.ge.s32.totalorder %s11, 4
    %s18 = sphi 0, %s30
    %s19 = sphi 0, %s26
    %s20 = sphi 0, %s18
    %s21 = sphi 0, %s19
    %s22 = sphi 0, %s20
    %s23 = sphi 0, %s21
    %s33 = sphi 0, %s35
    %s36 = sphi 0, %s33
    %s37 = sphi 0, %s36
    %s53 = sphi 0, %s37
    %s59 = sphi 0, %s61
    %s62 = sphi 0, %s59
    %s63 = sphi 0, %s62
    %s79 = sphi 0, %s63
    %s87 = sphi 0, %s89
    %s90 = sphi 0, %s87
    %s91 = sphi 0, %s90
    %s107 = sphi 0, %s91
    %s115 = sphi 0, %s117
    %s118 = sphi 0, %s115
    %s119 = sphi 0, %s118
    %s135 = sphi 0, %s119
    %s143 = sphi 0, %s145
    %s146 = sphi 0, %s143
    %s147 = sphi 0, %s146
    %s163 = sphi 0, %s147
  $region4: #{conv_layer2d.2} parent=0 // loop_header_branch
    %14 = sbr.rel (%p12) target = $region8
  $region5: #{conv_layer2d.2} parent=0 // loop_body
    %s16 = ssub.s32 %s11, 1
    %s17 = ssub.s32 %s11, 2
    %s24 = sadd.s32 1, %s19
    %p25 = scmp.ge.s32.totalorder %s24, 1
    %s26 = scalar_select %p25, 0, %s24
    %s27 = sadd.s32 1, %s18
    %s28 = scalar_select %p25, %s27, %s18
    %p29 = scmp.ge.s32.totalorder %s28, 2
    %s30 = scalar_select %p29, 0, %s28
    %s31 = ssub.s32 %s18, %s30
    %p32 = scmp.eq.s32.totalorder %s31, 0
    %s34 = sadd.s32 %s33, 1
    %s35 = scalar_select %p32, %s33, %s34
    %p38 = pneg %p32
    %p39 = scmp.eq.s32.totalorder %s11, 1
    %p40 = por %p38, %p39
    %p41 = scmp.ne.s32.totalorder %s33, %s36
    %p42 = scmp.eq.s32.totalorder %s11, 0
    %p43 = por %p41, %p42
    %p44 = scmp.ne.s32.totalorder %s33, %s36
    %p45 = scmp.eq.s32.totalorder %s16, 1
    %p46 = por %p44, %p45
    %p47 = scmp.ne.s32.totalorder %s36, %s37
    %p48 = scmp.eq.s32.totalorder %s16, 0
    %p49 = por %p47, %p48
    %p50 = scmp.ne.s32.totalorder %s36, %s37
    %p51 = scmp.eq.s32.totalorder %s17, 1
    %p52 = por %p50, %p51
    %p54 = scmp.ne.s32.totalorder %s37, %s53
    %p55 = scmp.eq.s32.totalorder %s17, 0
    %p56 = por %p54, %p55
    %s57 = ssub.s32 %s19, %s26
    %p58 = scmp.eq.s32.totalorder %s57, 0
    %s60 = sadd.s32 %s59, 1
    %s61 = scalar_select %p58, %s59, %s60
    %p64 = pneg %p58
    %p65 = scmp.eq.s32.totalorder %s11, 1
    %p66 = por %p64, %p65
    %p67 = scmp.ne.s32.totalorder %s59, %s62
    %p68 = scmp.eq.s32.totalorder %s11, 0
    %p69 = por %p67, %p68
    %p70 = scmp.ne.s32.totalorder %s59, %s62
    %p71 = scmp.eq.s32.totalorder %s16, 1
    %p72 = por %p70, %p71
    %p73 = scmp.ne.s32.totalorder %s62, %s63
    %p74 = scmp.eq.s32.totalorder %s16, 0
    %p75 = por %p73, %p74
    %p76 = scmp.ne.s32.totalorder %s62, %s63
    %p77 = scmp.eq.s32.totalorder %s17, 1
    %p78 = por %p76, %p77
    %p80 = scmp.ne.s32.totalorder %s63, %s79
    %p81 = scmp.eq.s32.totalorder %s17, 0
    %p82 = por %p80, %p81
    %s83 = ssub.s32 %s18, %s30
    %s84 = ssub.s32 %s19, %s26
    %s85 = sor.u32 %s83, %s84
    %p86 = scmp.eq.s32.totalorder %s85, 0
    %s88 = sadd.s32 %s87, 1
    %s89 = scalar_select %p86, %s87, %s88
    %p92 = pneg %p86
    %p93 = scmp.eq.s32.totalorder %s11, 1
    %p94 = por %p92, %p93
    %p95 = scmp.ne.s32.totalorder %s87, %s90
    %p96 = scmp.eq.s32.totalorder %s11, 0
    %p97 = por %p95, %p96
    %p98 = scmp.ne.s32.totalorder %s87, %s90
    %p99 = scmp.eq.s32.totalorder %s16, 1
    %p100 = por %p98, %p99
    %p101 = scmp.ne.s32.totalorder %s90, %s91
    %p102 = scmp.eq.s32.totalorder %s16, 0
    %p103 = por %p101, %p102
    %p104 = scmp.ne.s32.totalorder %s90, %s91
    %p105 = scmp.eq.s32.totalorder %s17, 1
    %p106 = por %p104, %p105
    %p108 = scmp.ne.s32.totalorder %s91, %s107
    %p109 = scmp.eq.s32.totalorder %s17, 0
    %p110 = por %p108, %p109
    %s111 = ssub.s32 %s18, %s30
    %s112 = ssub.s32 %s19, %s26
    %s113 = sor.u32 %s111, %s112
    %p114 = scmp.eq.s32.totalorder %s113, 0
    %s116 = sadd.s32 %s115, 1
    %s117 = scalar_select %p114, %s115, %s116
    %p120 = pneg %p114
    %p121 = scmp.eq.s32.totalorder %s11, 1
    %p122 = por %p120, %p121
    %p123 = scmp.ne.s32.totalorder %s115, %s118
    %p124 = scmp.eq.s32.totalorder %s11, 0
    %p125 = por %p123, %p124
    %p126 = scmp.ne.s32.totalorder %s115, %s118
    %p127 = scmp.eq.s32.totalorder %s16, 1
    %p128 = por %p126, %p127
    %p129 = scmp.ne.s32.totalorder %s118, %s119
    %p130 = scmp.eq.s32.totalorder %s16, 0
    %p131 = por %p129, %p130
    %p132 = scmp.ne.s32.totalorder %s118, %s119
    %p133 = scmp.eq.s32.totalorder %s17, 1
    %p134 = por %p132, %p133
    %p136 = scmp.ne.s32.totalorder %s119, %s135
    %p137 = scmp.eq.s32.totalorder %s17, 0
    %p138 = por %p136, %p137
    %s139 = ssub.s32 %s18, %s30
    %s140 = ssub.s32 %s19, %s26
    %s141 = sor.u32 %s139, %s140
    %p142 = scmp.eq.s32.totalorder %s141, 0
    %s144 = sadd.s32 %s143, 1
    %s145 = scalar_select %p142, %s143, %s144
    %p148 = pneg %p142
    %p149 = scmp.eq.s32.totalorder %s11, 1
    %p150 = por %p148, %p149
    %p151 = scmp.ne.s32.totalorder %s143, %s146
    %p152 = scmp.eq.s32.totalorder %s11, 0
    %p153 = por %p151, %p152
    %p154 = scmp.ne.s32.totalorder %s143, %s146
    %p155 = scmp.eq.s32.totalorder %s16, 1
    %p156 = por %p154, %p155
    %p157 = scmp.ne.s32.totalorder %s146, %s147
    %p158 = scmp.eq.s32.totalorder %s16, 0
    %p159 = por %p157, %p158
    %p160 = scmp.ne.s32.totalorder %s146, %s147
    %p161 = scmp.eq.s32.totalorder %s17, 1
    %p162 = por %p160, %p161
    %p164 = scmp.ne.s32.totalorder %s147, %s163
    %p165 = scmp.eq.s32.totalorder %s17, 0
    %p166 = por %p164, %p165
    %p167 = scmp.le.s32.totalorder 1, %s11
    %p168 = scmp.lt.s32.totalorder %s11, 3
    %p169 = pnand %p167, %p168
    %p170 = pneg %p169
    // Predicated region
    $region9: #{conv_layer2d.2} parent=5 // pred_check
      _
    $region10: #{conv_layer2d.2} parent=5 // pred_check_branch
      %172 = sbr.rel (%p169) target = $region12
    $region11: #{conv_layer2d.2} parent=5 // pred_region
      %s173 = ssub.s32 %s11, 1
      // Predicated region
      $region13: #{conv_layer2d.2} parent=11 // pred_check
        %p174 = pneg %p75
      $region14: #{conv_layer2d.2} parent=11 // pred_check_branch
        %176 = sbr.rel (%p174) target = $region16
      $region15: #{conv_layer2d.2} parent=11 // pred_region
        %p177 = scmp.lt.s32.totalorder %s21, 0
        %s178 = scalar_select %p177, %s21, 0
        %s179 = smul.addr %s178, 4
        %s180 = scalar_lea.vmem %s1, %s179
      $region16: #{conv_layer2d.2} parent=11 // pred_fallthru
        _
    $region12: #{conv_layer2d.2} parent=5 // pred_fallthru
      _
    %p181 = scmp.lt.s32.totalorder %s11, 2
    // Predicated region
    $region17: #{conv_layer2d.2} parent=5 // pred_check
      %p182 = pneg %p181
    $region18: #{conv_layer2d.2} parent=5 // pred_check_branch
      %184 = sbr.rel (%p182) target = $region20
    $region19: #{conv_layer2d.2} parent=5 // pred_region
      // Predicated region
      $region21: #{conv_layer2d.2} parent=19 // pred_check
        %p185 = pneg %p43
      $region22: #{conv_layer2d.2} parent=19 // pred_check_branch
        %187 = sbr.rel (%p185) target = $region24
      $region23: #{conv_layer2d.2} parent=19 // pred_region
        %s188 = smul.u32 32, %s18
        %p189 = scmp.lt.s32.totalorder %s188, 63
        %s190 = scalar_select %p189, %s188, 63
        %s191 = smul.addr %s190, 4
        %s192 = scalar_lea.vmem %s0, %s191
        %s193 = smul.u32 32, %s18
      $region24: #{conv_layer2d.2} parent=19 // pred_fallthru
        _
    $region20: #{conv_layer2d.2} parent=5 // pred_fallthru
      _
    %p194 = scmp.le.s32.totalorder 1, %s11
    %p195 = scmp.lt.s32.totalorder %s11, 3
    %p196 = pnand %p194, %p195
    %p197 = pneg %p196
    // Predicated region
    $region25: #{conv_layer2d.2} parent=5 // pred_check
      _
    $region26: #{conv_layer2d.2} parent=5 // pred_check_branch
      %199 = sbr.rel (%p196) target = $region28
    $region27: #{conv_layer2d.2} parent=5 // pred_region
      %s200 = ssub.s32 %s11, 1
      %s201 = smul.u32 32, %s20
      %p202 = scmp.lt.s32.totalorder %s201, 63
      %s203 = scalar_select %p202, %s201, 63
      %s204 = smul.addr %s203, 4
      %s205 = scalar_lea.vmem %s0, %s204
      %p206 = pneg %p49
      %p207 = pneg %p46
      %p208 = scmp.lt.s32.totalorder %s21, 0
      %s209 = scalar_select %p208, %s21, 0
      %s210 = smul.addr %s209, 4
      %s211 = scalar_lea.vmem %s1, %s210
      %p212 = pneg %p75
      %p213 = pneg %p72
      %p214 = pneg %p103
      %p215 = pneg %p100
      %s216 = smul.u32 32, %s20
      %p217 = scmp.lt.s32.totalorder %s216, 63
      %s218 = scalar_select %p217, %s216, 63
      %p219 = scmp.lt.s32.totalorder %s21, 0
      %s220 = scalar_select %p219, %s21, 0
      %s221 = sadd.s32 %s220, %s218
      %s222 = smul.addr %s221, 4
      %s223 = scalar_lea.vmem %s2, %s222
      %p224 = pneg %p131
      %p225 = pneg %p128
      %p226 = scmp.lt.s32.totalorder %s20, 1
      %s227 = scalar_select %p226, %s20, 1
      %p228 = scmp.lt.s32.totalorder %s21, 0
      %s229 = scalar_select %p228, %s21, 0
      %s230 = sadd.s32 %s229, %s227
      %s231 = smul.addr %s230, 8
      %s232 = scalar_lea.vmem %s3, %s231
      %p233 = pneg %p159
      %p234 = pneg %p156
      %p235 = scmp.lt.s32.totalorder %s20, 1
      %s236 = scalar_select %p235, %s20, 1
      %p237 = scmp.lt.s32.totalorder %s21, 0
      %s238 = scalar_select %p237, %s21, 0
      %s239 = sadd.s32 %s238, %s236
      %s240 = smul.addr %s239, 8
      %s241 = scalar_lea.vmem %s4, %s240
      %s242 = smul.u32 32, %s20
      %p243 = scmp.lt.s32.totalorder %s242, 63
      %s244 = scalar_select %p243, %s242, 63
      %s245 = smul.addr %s244, 4
      %s246 = scalar_lea.vmem %s0, %s245
      %s247 = smul.u32 32, %s20
      %p248 = scmp.lt.s32.totalorder %s21, 0
      %s249 = scalar_select %p248, %s21, 0
      %s250 = smul.addr %s249, 4
      %s251 = scalar_lea.vmem %s1, %s250
      %s252 = smul.u32 32, %s20
      %p253 = scmp.lt.s32.totalorder %s252, 63
      %s254 = scalar_select %p253, %s252, 63
      %p255 = scmp.lt.s32.totalorder %s21, 0
      %s256 = scalar_select %p255, %s21, 0
      %s257 = sadd.s32 %s256, %s254
      %s258 = smul.addr %s257, 4
      %s259 = scalar_lea.vmem %s2, %s258
      %s260 = smul.u32 32, %s20
      %p261 = scmp.lt.s32.totalorder %s20, 1
      %s262 = scalar_select %p261, %s20, 1
      %p263 = scmp.lt.s32.totalorder %s21, 0
      %s264 = scalar_select %p263, %s21, 0
      %s265 = sadd.s32 %s264, %s262
      %s266 = smul.addr %s265, 8
      %s267 = scalar_lea.vmem %s3, %s266
      %p268 = scmp.lt.s32.totalorder %s20, 1
      %s269 = scalar_select %p268, %s20, 1
      %p270 = scmp.lt.s32.totalorder %s21, 0
      %s271 = scalar_select %p270, %s21, 0
      %s272 = sadd.s32 %s271, %s269
      %s273 = smul.addr %s272, 8
      %s274 = scalar_lea.vmem %s4, %s273
      %v275 = vld [vmem:[%s246] sm:$0xf]
      %v276 = vld [vmem:[%s246 + $0x4] sm:$0xf]
      %v277 = vld [vmem:[%s246 + $0x8] sm:$0xf]
      %v278 = vld [vmem:[%s246 + $0xc] sm:$0xf]
      %v279 = vld [vmem:[%s246 + $0x10] sm:$0xf]
      %v280 = vld [vmem:[%s246 + $0x14] sm:$0xf]
      %v281 = vld [vmem:[%s246 + $0x18] sm:$0xf]
      %v282 = vld [vmem:[%s246 + $0x1c] sm:$0xf]
      %v283 = vld [vmem:[%s246 + $0x20] sm:$0xf]
      %v284 = vld [vmem:[%s246 + $0x24] sm:$0xf]
      %v285 = vld [vmem:[%s246 + $0x28] sm:$0xf]
      %v286 = vld [vmem:[%s246 + $0x2c] sm:$0xf]
      %v287 = vld [vmem:[%s246 + $0x30] sm:$0xf]
      %v288 = vld [vmem:[%s246 + $0x34] sm:$0xf]
      %v289 = vld [vmem:[%s246 + $0x38] sm:$0xf]
      %v290 = vld [vmem:[%s246 + $0x3c] sm:$0xf]
      %v291 = vld [vmem:[%s246 + $0x40] sm:$0xf]
      %v292 = vld [vmem:[%s246 + $0x44] sm:$0xf]
      %v293 = vld [vmem:[%s246 + $0x48] sm:$0xf]
      %v294 = vld [vmem:[%s246 + $0x4c] sm:$0xf]
      %v295 = vld [vmem:[%s246 + $0x50] sm:$0xf]
      %v296 = vld [vmem:[%s246 + $0x54] sm:$0xf]
      %v297 = vld [vmem:[%s246 + $0x58] sm:$0xf]
      %v298 = vld [vmem:[%s246 + $0x5c] sm:$0xf]
      %v299 = vld [vmem:[%s246 + $0x60] sm:$0xf]
      %v300 = vld [vmem:[%s246 + $0x64] sm:$0xf]
      %v301 = vld [vmem:[%s246 + $0x68] sm:$0xf]
      %v302 = vld [vmem:[%s246 + $0x6c] sm:$0xf]
      %v303 = vld [vmem:[%s246 + $0x70] sm:$0xf]
      %v304 = vld [vmem:[%s246 + $0x74] sm:$0xf]
      %v305 = vld [vmem:[%s246 + $0x78] sm:$0xf]
      %v306 = vld [vmem:[%s246 + $0x7c] sm:$0xf]
      %v307 = vld [vmem:[%s251] sm:$0xf]
      %v308 = vld [vmem:[%s251 + $0x4] sm:$0xf]
      %v309 = vld [vmem:[%s251 + $0x8] sm:$0xf]
      %v310 = vld [vmem:[%s251 + $0xc] sm:$0xf]
      %v311 = vld [vmem:[%s251 + $0x10] sm:$0xf]
      %v312 = vld [vmem:[%s251 + $0x14] sm:$0xf]
      %v313 = vld [vmem:[%s251 + $0x18] sm:$0xf]
      %v314 = vld [vmem:[%s251 + $0x1c] sm:$0xf]
      %v315 = vld [vmem:[%s251 + $0x20] sm:$0xf]
      %v316 = vld [vmem:[%s251 + $0x24] sm:$0xf]
      %v317 = vld [vmem:[%s251 + $0x28] sm:$0xf]
      %v318 = vld [vmem:[%s251 + $0x2c] sm:$0xf]
      %v319 = vld [vmem:[%s251 + $0x30] sm:$0xf]
      %v320 = vld [vmem:[%s251 + $0x34] sm:$0xf]
      %v321 = vld [vmem:[%s251 + $0x38] sm:$0xf]
      %v322 = vld [vmem:[%s251 + $0x3c] sm:$0xf]
      %v355 = vunpack.c.l.b16 %v275
      %v356 = vunpack.c.l.b16 %v276
      %v357 = vunpack.c.l.b16 %v277
      %v358 = vunpack.c.l.b16 %v278
      %v359 = vunpack.c.l.b16 %v279
      %v360 = vunpack.c.l.b16 %v280
      %v361 = vunpack.c.l.b16 %v281
      %v362 = vunpack.c.l.b16 %v282
      %v363 = vunpack.c.l.b16 %v283
      %v364 = vunpack.c.l.b16 %v284
      %v365 = vunpack.c.l.b16 %v285
      %v366 = vunpack.c.l.b16 %v286
      %v367 = vunpack.c.l.b16 %v287
      %v368 = vunpack.c.l.b16 %v288
      %v369 = vunpack.c.l.b16 %v289
      %v370 = vunpack.c.l.b16 %v290
      %v371 = vunpack.c.l.b16 %v291
      %v372 = vunpack.c.l.b16 %v292
      %v373 = vunpack.c.l.b16 %v293
      %v374 = vunpack.c.l.b16 %v294
      %v375 = vunpack.c.l.b16 %v295
      %v376 = vunpack.c.l.b16 %v296
      %v377 = vunpack.c.l.b16 %v297
      %v378 = vunpack.c.l.b16 %v298
      %v379 = vunpack.c.l.b16 %v299
      %v380 = vunpack.c.l.b16 %v300
      %v381 = vunpack.c.l.b16 %v301
      %v382 = vunpack.c.l.b16 %v302
      %v383 = vunpack.c.l.b16 %v303
      %v384 = vunpack.c.l.b16 %v304
      %v385 = vunpack.c.l.b16 %v305
      %v386 = vunpack.c.l.b16 %v306
      %v387 = vpack.c.b16 %v356, %v355
      %v388 = vpack.c.b16 %v358, %v357
      %v389 = vpack.c.b16 %v360, %v359
      %v390 = vpack.c.b16 %v362, %v361
      %v391 = vpack.c.b16 %v364, %v363
      %v392 = vpack.c.b16 %v366, %v365
      %v393 = vpack.c.b16 %v368, %v367
      %v394 = vpack.c.b16 %v370, %v369
      %v395 = vpack.c.b16 %v372, %v371
      %v396 = vpack.c.b16 %v374, %v373
      %v397 = vpack.c.b16 %v376, %v375
      %v398 = vpack.c.b16 %v378, %v377
      %v399 = vpack.c.b16 %v380, %v379
      %v400 = vpack.c.b16 %v382, %v381
      %v401 = vpack.c.b16 %v384, %v383
      %v402 = vpack.c.b16 %v386, %v385
      %v435 = vunpack.c.l.b16 %v307
      %v436 = vunpack.c.l.b16 %v308
      %v437 = vunpack.c.l.b16 %v309
      %v438 = vunpack.c.l.b16 %v310
      %v439 = vunpack.c.l.b16 %v311
      %v440 = vunpack.c.l.b16 %v312
      %v441 = vunpack.c.l.b16 %v313
      %v442 = vunpack.c.l.b16 %v314
      %v443 = vunpack.c.l.b16 %v315
      %v444 = vunpack.c.l.b16 %v316
      %v445 = vunpack.c.l.b16 %v317
      %v446 = vunpack.c.l.b16 %v318
      %v447 = vunpack.c.l.b16 %v319
      %v448 = vunpack.c.l.b16 %v320
      %v449 = vunpack.c.l.b16 %v321
      %v450 = vunpack.c.l.b16 %v322
      %v451 = vpack.c.b16 %v436, %v435
      %v452 = vpack.c.b16 %v438, %v437
      %v453 = vpack.c.b16 %v440, %v439
      %v454 = vpack.c.b16 %v442, %v441
      %v455 = vpack.c.b16 %v444, %v443
      %v456 = vpack.c.b16 %v446, %v445
      %v457 = vpack.c.b16 %v448, %v447
      %v458 = vpack.c.b16 %v450, %v449
      %467 = vmatpush.bf16.msra.mxu0 %v458
      %468 = vmatpush.bf16.msra.mxu0 %v457
      %469 = vmatpush.bf16.msra.mxu0 %v456
      %470 = vmatpush.bf16.msra.mxu0 %v455
      %471 = vmatpush.bf16.msra.mxu0 %v454
      %472 = vmatpush.bf16.msra.mxu0 %v453
      %473 = vmatpush.bf16.msra.mxu0 %v452
      %474 = vmatpush.bf16.msra.mxu0 %v451
      %475 = vmatmul.bf16.gmra.mxu0 %v387
      %v476 = vpop.f32.mrf.mxu0
      %v477 = vadd.f32 0.0, %v476
      %v478 = vpop.f32.mrf.mxu0
      %v479 = vadd.f32 0.0, %v478
      %480 = vmatmul.bf16.gmra.mxu0 %v388
      %v481 = vpop.f32.mrf.mxu0
      %v482 = vadd.f32 0.0, %v481
      %v483 = vpop.f32.mrf.mxu0
      %v484 = vadd.f32 0.0, %v483
      %485 = vmatmul.bf16.gmra.mxu0 %v389
      %v486 = vpop.f32.mrf.mxu0
      %v487 = vadd.f32 0.0, %v486
      %v488 = vpop.f32.mrf.mxu0
      %v489 = vadd.f32 0.0, %v488
      %490 = vmatmul.bf16.gmra.mxu0 %v390
      %v491 = vpop.f32.mrf.mxu0
      %v492 = vadd.f32 0.0, %v491
      %v493 = vpop.f32.mrf.mxu0
      %v494 = vadd.f32 0.0, %v493
      %495 = vmatmul.bf16.gmra.mxu0 %v391
      %v496 = vpop.f32.mrf.mxu0
      %v497 = vadd.f32 0.0, %v496
      %v498 = vpop.f32.mrf.mxu0
      %v499 = vadd.f32 0.0, %v498
      %500 = vmatmul.bf16.gmra.mxu0 %v392
      %v501 = vpop.f32.mrf.mxu0
      %v502 = vadd.f32 0.0, %v501
      %v503 = vpop.f32.mrf.mxu0
      %v504 = vadd.f32 0.0, %v503
      %505 = vmatmul.bf16.gmra.mxu0 %v393
      %v506 = vpop.f32.mrf.mxu0
      %v507 = vadd.f32 0.0, %v506
      %v508 = vpop.f32.mrf.mxu0
      %v509 = vadd.f32 0.0, %v508
      %510 = vmatmul.bf16.gmra.mxu0 %v394
      %v511 = vpop.f32.mrf.mxu0
      %v512 = vadd.f32 0.0, %v511
      %v513 = vpop.f32.mrf.mxu0
      %v514 = vadd.f32 0.0, %v513
      %515 = vmatmul.bf16.gmra.mxu0 %v395
      %v516 = vpop.f32.mrf.mxu0
      %v517 = vadd.f32 0.0, %v516
      %v518 = vpop.f32.mrf.mxu0
      %v519 = vadd.f32 0.0, %v518
      %520 = vmatmul.bf16.gmra.mxu0 %v396
      %v521 = vpop.f32.mrf.mxu0
      %v522 = vadd.f32 0.0, %v521
      %v523 = vpop.f32.mrf.mxu0
      %v524 = vadd.f32 0.0, %v523
      %525 = vmatmul.bf16.gmra.mxu0 %v397
      %v526 = vpop.f32.mrf.mxu0
      %v527 = vadd.f32 0.0, %v526
      %v528 = vpop.f32.mrf.mxu0
      %v529 = vadd.f32 0.0, %v528
      %530 = vmatmul.bf16.gmra.mxu0 %v398
      %v531 = vpop.f32.mrf.mxu0
      %v532 = vadd.f32 0.0, %v531
      %v533 = vpop.f32.mrf.mxu0
      %v534 = vadd.f32 0.0, %v533
      %535 = vmatmul.bf16.gmra.mxu0 %v399
      %v536 = vpop.f32.mrf.mxu0
      %v537 = vadd.f32 0.0, %v536
      %v538 = vpop.f32.mrf.mxu0
      %v539 = vadd.f32 0.0, %v538
      %540 = vmatmul.bf16.gmra.mxu0 %v400
      %v541 = vpop.f32.mrf.mxu0
      %v542 = vadd.f32 0.0, %v541
      %v543 = vpop.f32.mrf.mxu0
      %v544 = vadd.f32 0.0, %v543
      %545 = vmatmul.bf16.gmra.mxu0 %v401
      %v546 = vpop.f32.mrf.mxu0
      %v547 = vadd.f32 0.0, %v546
      %v548 = vpop.f32.mrf.mxu0
      %v549 = vadd.f32 0.0, %v548
      %550 = vmatmul.bf16.gmra.mxu0 %v402
      %v551 = vpop.f32.mrf.mxu0
      %v552 = vadd.f32 0.0, %v551
      %v553 = vpop.f32.mrf.mxu0
      %v554 = vadd.f32 0.0, %v553
      %555 = vdwg.mxu0
      %v556 = vpack.c.bf16 %v477, %v477
      %v557 = vpack.c.bf16 %v479, %v479
      %v558 = vpack.c.bf16 %v482, %v482
      %v559 = vpack.c.bf16 %v484, %v484
      %v560 = vpack.c.bf16 %v487, %v487
      %v561 = vpack.c.bf16 %v489, %v489
      %v562 = vpack.c.bf16 %v492, %v492
      %v563 = vpack.c.bf16 %v494, %v494
      %v564 = vpack.c.bf16 %v497, %v497
      %v565 = vpack.c.bf16 %v499, %v499
      %v566 = vpack.c.bf16 %v502, %v502
      %v567 = vpack.c.bf16 %v504, %v504
      %v568 = vpack.c.bf16 %v507, %v507
      %v569 = vpack.c.bf16 %v509, %v509
      %v570 = vpack.c.bf16 %v512, %v512
      %v571 = vpack.c.bf16 %v514, %v514
      %v572 = vpack.c.bf16 %v517, %v517
      %v573 = vpack.c.bf16 %v519, %v519
      %v574 = vpack.c.bf16 %v522, %v522
      %v575 = vpack.c.bf16 %v524, %v524
      %v576 = vpack.c.bf16 %v527, %v527
      %v577 = vpack.c.bf16 %v529, %v529
      %v578 = vpack.c.bf16 %v532, %v532
      %v579 = vpack.c.bf16 %v534, %v534
      %v580 = vpack.c.bf16 %v537, %v537
      %v581 = vpack.c.bf16 %v539, %v539
      %v582 = vpack.c.bf16 %v542, %v542
      %v583 = vpack.c.bf16 %v544, %v544
      %v584 = vpack.c.bf16 %v547, %v547
      %v585 = vpack.c.bf16 %v549, %v549
      %v586 = vpack.c.bf16 %v552, %v552
      %v587 = vpack.c.bf16 %v554, %v554
      %588 = vst [vmem:[%s259] sm:$0xf] %v556
      %589 = vst [vmem:[%s259 + $0x4] sm:$0xf] %v557
      %590 = vst [vmem:[%s259 + $0x8] sm:$0xf] %v558
      %591 = vst [vmem:[%s259 + $0xc] sm:$0xf] %v559
      %592 = vst [vmem:[%s259 + $0x10] sm:$0xf] %v560
      %593 = vst [vmem:[%s259 + $0x14] sm:$0xf] %v561
      %594 = vst [vmem:[%s259 + $0x18] sm:$0xf] %v562
      %595 = vst [vmem:[%s259 + $0x1c] sm:$0xf] %v563
      %596 = vst [vmem:[%s259 + $0x20] sm:$0xf] %v564
      %597 = vst [vmem:[%s259 + $0x24] sm:$0xf] %v565
      %598 = vst [vmem:[%s259 + $0x28] sm:$0xf] %v566
      %599 = vst [vmem:[%s259 + $0x2c] sm:$0xf] %v567
      %600 = vst [vmem:[%s259 + $0x30] sm:$0xf] %v568
      %601 = vst [vmem:[%s259 + $0x34] sm:$0xf] %v569
      %602 = vst [vmem:[%s259 + $0x38] sm:$0xf] %v570
      %603 = vst [vmem:[%s259 + $0x3c] sm:$0xf] %v571
      %604 = vst [vmem:[%s259 + $0x40] sm:$0xf] %v572
      %605 = vst [vmem:[%s259 + $0x44] sm:$0xf] %v573
      %606 = vst [vmem:[%s259 + $0x48] sm:$0xf] %v574
      %607 = vst [vmem:[%s259 + $0x4c] sm:$0xf] %v575
      %608 = vst [vmem:[%s259 + $0x50] sm:$0xf] %v576
      %609 = vst [vmem:[%s259 + $0x54] sm:$0xf] %v577
      %610 = vst [vmem:[%s259 + $0x58] sm:$0xf] %v578
      %611 = vst [vmem:[%s259 + $0x5c] sm:$0xf] %v579
      %612 = vst [vmem:[%s259 + $0x60] sm:$0xf] %v580
      %613 = vst [vmem:[%s259 + $0x64] sm:$0xf] %v581
      %614 = vst [vmem:[%s259 + $0x68] sm:$0xf] %v582
      %615 = vst [vmem:[%s259 + $0x6c] sm:$0xf] %v583
      %616 = vst [vmem:[%s259 + $0x70] sm:$0xf] %v584
      %617 = vst [vmem:[%s259 + $0x74] sm:$0xf] %v585
      %618 = vst [vmem:[%s259 + $0x78] sm:$0xf] %v586
      %619 = vst [vmem:[%s259 + $0x7c] sm:$0xf] %v587
      %v620 = vadd.f32 %v477, %v479
      %v621 = vadd.f32 %v620, %v482
      %v622 = vadd.f32 %v621, %v484
      %v623 = vadd.f32 %v622, %v487
      %v624 = vadd.f32 %v623, %v489
      %v625 = vadd.f32 %v624, %v492
      %v626 = vadd.f32 %v625, %v494
      %v627 = vadd.f32 %v626, %v497
      %v628 = vadd.f32 %v627, %v499
      %v629 = vadd.f32 %v628, %v502
      %v630 = vadd.f32 %v629, %v504
      %v631 = vadd.f32 %v630, %v507
      %v632 = vadd.f32 %v631, %v509
      %v633 = vadd.f32 %v632, %v512
      %v634 = vadd.f32 %v633, %v514
      %v635 = vadd.f32 %v634, %v517
      %v636 = vadd.f32 %v635, %v519
      %v637 = vadd.f32 %v636, %v522
      %v638 = vadd.f32 %v637, %v524
      %v639 = vadd.f32 %v638, %v527
      %v640 = vadd.f32 %v639, %v529
      %v641 = vadd.f32 %v640, %v532
      %v642 = vadd.f32 %v641, %v534
      %v643 = vadd.f32 %v642, %v537
      %v644 = vadd.f32 %v643, %v539
      %v645 = vadd.f32 %v644, %v542
      %v646 = vadd.f32 %v645, %v544
      %v647 = vadd.f32 %v646, %v547
      %v648 = vadd.f32 %v647, %v549
      %v649 = vadd.f32 %v648, %v552
      %v650 = vadd.f32 %v649, %v554
      %v651 = vrot.slane %v650, 4
      %v652 = vadd.f32 %v650, %v651
      %v653 = vrot.slane %v652, 2
      %v654 = vadd.f32 %v652, %v653
      %v655 = vrot.slane %v654, 1
      %v656 = vadd.f32 %v654, %v655
      %v657 = vmul.f32 %v477, %v477
      %v658 = vmul.f32 %v479, %v479
      %v659 = vmul.f32 %v482, %v482
      %v660 = vmul.f32 %v484, %v484
      %v661 = vmul.f32 %v487, %v487
      %v662 = vmul.f32 %v489, %v489
      %v663 = vmul.f32 %v492, %v492
      %v664 = vmul.f32 %v494, %v494
      %v665 = vmul.f32 %v497, %v497
      %v666 = vmul.f32 %v499, %v499
      %v667 = vmul.f32 %v502, %v502
      %v668 = vmul.f32 %v504, %v504
      %v669 = vmul.f32 %v507, %v507
      %v670 = vmul.f32 %v509, %v509
      %v671 = vmul.f32 %v512, %v512
      %v672 = vmul.f32 %v514, %v514
      %v673 = vmul.f32 %v517, %v517
      %v674 = vmul.f32 %v519, %v519
      %v675 = vmul.f32 %v522, %v522
      %v676 = vmul.f32 %v524, %v524
      %v677 = vmul.f32 %v527, %v527
      %v678 = vmul.f32 %v529, %v529
      %v679 = vmul.f32 %v532, %v532
      %v680 = vmul.f32 %v534, %v534
      %v681 = vmul.f32 %v537, %v537
      %v682 = vmul.f32 %v539, %v539
      %v683 = vmul.f32 %v542, %v542
      %v684 = vmul.f32 %v544, %v544
      %v685 = vmul.f32 %v547, %v547
      %v686 = vmul.f32 %v549, %v549
      %v687 = vmul.f32 %v552, %v552
      %v688 = vmul.f32 %v554, %v554
      %v689 = vadd.f32 %v657, %v658
      %v690 = vadd.f32 %v689, %v659
      %v691 = vadd.f32 %v690, %v660
      %v692 = vadd.f32 %v691, %v661
      %v693 = vadd.f32 %v692, %v662
      %v694 = vadd.f32 %v693, %v663
      %v695 = vadd.f32 %v694, %v664
      %v696 = vadd.f32 %v695, %v665
      %v697 = vadd.f32 %v696, %v666
      %v698 = vadd.f32 %v697, %v667
      %v699 = vadd.f32 %v698, %v668
      %v700 = vadd.f32 %v699, %v669
      %v701 = vadd.f32 %v700, %v670
      %v702 = vadd.f32 %v701, %v671
      %v703 = vadd.f32 %v702, %v672
      %v704 = vadd.f32 %v703, %v673
      %v705 = vadd.f32 %v704, %v674
      %v706 = vadd.f32 %v705, %v675
      %v707 = vadd.f32 %v706, %v676
      %v708 = vadd.f32 %v707, %v677
      %v709 = vadd.f32 %v708, %v678
      %v710 = vadd.f32 %v709, %v679
      %v711 = vadd.f32 %v710, %v680
      %v712 = vadd.f32 %v711, %v681
      %v713 = vadd.f32 %v712, %v682
      %v714 = vadd.f32 %v713, %v683
      %v715 = vadd.f32 %v714, %v684
      %v716 = vadd.f32 %v715, %v685
      %v717 = vadd.f32 %v716, %v686
      %v718 = vadd.f32 %v717, %v687
      %v719 = vadd.f32 %v718, %v688
      %v720 = vrot.slane %v719, 4
      %v721 = vadd.f32 %v719, %v720
      %v722 = vrot.slane %v721, 2
      %v723 = vadd.f32 %v721, %v722
      %v724 = vrot.slane %v723, 1
      %v725 = vadd.f32 %v723, %v724
      %726 = vst [vmem:[%s267] sm:$0xff] %v656
      %727 = vst [vmem:[%s274] sm:$0xff] %v725
      %s728 = smul.u32 32, %s20
      %p729 = scmp.lt.s32.totalorder %s728, 63
      %s730 = scalar_select %p729, %s728, 63
      %p731 = scmp.lt.s32.totalorder %s21, 0
      %s732 = scalar_select %p731, %s21, 0
      %s733 = sadd.s32 %s732, %s730
      %s734 = smul.addr %s733, 4
      %s735 = scalar_lea.vmem %s2, %s734
      %p736 = scmp.lt.s32.totalorder %s20, 1
      %s737 = scalar_select %p736, %s20, 1
      %p738 = scmp.lt.s32.totalorder %s21, 0
      %s739 = scalar_select %p738, %s21, 0
      %s740 = sadd.s32 %s739, %s737
      %s741 = smul.addr %s740, 8
      %s742 = scalar_lea.vmem %s3, %s741
      %p743 = scmp.lt.s32.totalorder %s20, 1
      %s744 = scalar_select %p743, %s20, 1
      %p745 = scmp.lt.s32.totalorder %s21, 0
      %s746 = scalar_select %p745, %s21, 0
      %s747 = sadd.s32 %s746, %s744
      %s748 = smul.addr %s747, 8
      %s749 = scalar_lea.vmem %s4, %s748
      // Predicated region
      $region29: #{conv_layer2d.2} parent=27 // pred_check
        %p750 = pneg %p100
      $region30: #{conv_layer2d.2} parent=27 // pred_check_branch
        %752 = sbr.rel (%p750) target = $region32
      $region31: #{conv_layer2d.2} parent=27 // pred_region
        %s753 = smul.u32 32, %s20
      $region32: #{conv_layer2d.2} parent=27 // pred_fallthru
        _
      // Predicated region
      $region33: #{conv_layer2d.2} parent=27 // pred_check
        %p754 = pneg %p128
      $region34: #{conv_layer2d.2} parent=27 // pred_check_branch
        %756 = sbr.rel (%p754) target = $region36
      $region35: #{conv_layer2d.2} parent=27 // pred_region
        _
      $region36: #{conv_layer2d.2} parent=27 // pred_fallthru
        _
      // Predicated region
      $region37: #{conv_layer2d.2} parent=27 // pred_check
        %p757 = pneg %p156
      $region38: #{conv_layer2d.2} parent=27 // pred_check_branch
        %759 = sbr.rel (%p757) target = $region40
      $region39: #{conv_layer2d.2} parent=27 // pred_region
        _
      $region40: #{conv_layer2d.2} parent=27 // pred_fallthru
        _
    $region28: #{conv_layer2d.2} parent=5 // pred_fallthru
      _
    %p760 = scmp.le.s32.totalorder 2, %s11
    // Predicated region
    $region41: #{conv_layer2d.2} parent=5 // pred_check
      %p761 = pneg %p760
    $region42: #{conv_layer2d.2} parent=5 // pred_check_branch
      %763 = sbr.rel (%p761) target = $region44
    $region43: #{conv_layer2d.2} parent=5 // pred_region
      %s764 = ssub.s32 %s11, 2
      // Predicated region
      $region45: #{conv_layer2d.2} parent=43 // pred_check
        %p765 = pneg %p106
      $region46: #{conv_layer2d.2} parent=43 // pred_check_branch
        %767 = sbr.rel (%p765) target = $region48
      $region47: #{conv_layer2d.2} parent=43 // pred_region
        %s768 = smul.u32 32, %s22
        %p769 = scmp.lt.s32.totalorder %s768, 63
        %s770 = scalar_select %p769, %s768, 63
        %p771 = scmp.lt.s32.totalorder %s23, 0
        %s772 = scalar_select %p771, %s23, 0
        %s773 = sadd.s32 %s772, %s770
        %s774 = smul.addr %s773, 4
        %s775 = scalar_lea.vmem %s2, %s774
      $region48: #{conv_layer2d.2} parent=43 // pred_fallthru
        _
      // Predicated region
      $region49: #{conv_layer2d.2} parent=43 // pred_check
        %p776 = pneg %p134
      $region50: #{conv_layer2d.2} parent=43 // pred_check_branch
        %778 = sbr.rel (%p776) target = $region52
      $region51: #{conv_layer2d.2} parent=43 // pred_region
        %p779 = scmp.lt.s32.totalorder %s22, 1
        %s780 = scalar_select %p779, %s22, 1
        %p781 = scmp.lt.s32.totalorder %s23, 0
        %s782 = scalar_select %p781, %s23, 0
        %s783 = sadd.s32 %s782, %s780
        %s784 = smul.addr %s783, 8
        %s785 = scalar_lea.vmem %s3, %s784
      $region52: #{conv_layer2d.2} parent=43 // pred_fallthru
        _
      // Predicated region
      $region53: #{conv_layer2d.2} parent=43 // pred_check
        %p786 = pneg %p162
      $region54: #{conv_layer2d.2} parent=43 // pred_check_branch
        %788 = sbr.rel (%p786) target = $region56
      $region55: #{conv_layer2d.2} parent=43 // pred_region
        %p789 = scmp.lt.s32.totalorder %s22, 1
        %s790 = scalar_select %p789, %s22, 1
        %p791 = scmp.lt.s32.totalorder %s23, 0
        %s792 = scalar_select %p791, %s23, 0
        %s793 = sadd.s32 %s792, %s790
        %s794 = smul.addr %s793, 8
        %s795 = scalar_lea.vmem %s4, %s794
      $region56: #{conv_layer2d.2} parent=43 // pred_fallthru
        _
    $region44: #{conv_layer2d.2} parent=5 // pred_fallthru
      _
  $region6: #{conv_layer2d.2} parent=0 // loop_footer
    %s15 = sadd.s32 1, %s11
  $region7: #{conv_layer2d.2} parent=0 // loop_footer_branch
    %10 = sbr.rel target = $region3
  $region8: #{conv_layer2d.2} parent=0 // loop_exit
    _

</llo_original>
